<compile_context>
chip_gen: v5e
topology: v5e:2x2
jax: 0.10.0
libtpu: 0.0.40
codegen_flags: <defaults>
</compile_context>

<pallas_src>
import jax
import jax.numpy as jnp
from jax.experimental import pallas as pl
from jax.experimental.pallas import tpu as pltpu

INPUT_SIZE = 511
HIDDEN1 = 256
HIDDEN2 = 128
OUTPUT_SIZE = 8
PADDED_OUT = 128          # lane-dense fc3 output width (zeros beyond OUTPUT_SIZE)

# Largest batch tile.  At tb=2048: 2 x-buffers (f32, ~4 MiB each) + 2 out-buffers
# (f32 padded, ~1 MiB each) + bf16 weights (~0.75 MiB dbl-buffered) + kernel
# temporaries stay well under the vmem limit below on every chip generation.
MAX_BATCH_TILE = 2048
VMEM_LIMIT_BYTES = 48 * 1024 * 1024   # < v7x's 64 MiB physical; above v5e's 16 MiB default


def _round_up(n, m):
    return ((n + m - 1) // m) * m


def mlp_kernel(x_ref, w1_ref, b1_ref, w2_ref, b2_ref, w3_ref, b3_ref, o_ref):
    # x arrives as f32; cast to bf16 for the MXU (f32 accumulation throughout).
    x = x_ref[...].astype(jnp.bfloat16)
    # fc1 + ReLU
    h1 = jnp.dot(x, w1_ref[...], preferred_element_type=jnp.float32)
    h1 = jnp.maximum(h1 + b1_ref[...], 0.0).astype(jnp.bfloat16)
    # fc2 + ReLU
    h2 = jnp.dot(h1, w2_ref[...], preferred_element_type=jnp.float32)
    h2 = jnp.maximum(h2 + b2_ref[...], 0.0).astype(jnp.bfloat16)
    # fc3 (lane-dense: 128 output columns, extras are zero)
    out = jnp.dot(h2, w3_ref[...], preferred_element_type=jnp.float32)
    o_ref[...] = (out + b3_ref[...]).astype(o_ref.dtype)


def prepare_params(w1, b1, w2, b2, w3, b3):
    """One-time weight prep (hoisted out of the forward): bf16 casts + lane-dense fc3."""
    w1_b = w1.astype(jnp.bfloat16)                                   # (511, 256)
    w2_b = w2.astype(jnp.bfloat16)                                   # (256, 128)
    w3_p = jnp.pad(w3, ((0, 0), (0, PADDED_OUT - OUTPUT_SIZE))).astype(jnp.bfloat16)  # (128, 128)
    b3_p = jnp.pad(b3, ((0, 0), (0, PADDED_OUT - OUTPUT_SIZE)))      # (1, 128) f32
    # Biases stay f32 (added after f32 accumulation).
    return w1_b, b1, w2_b, b2, w3_p, b3_p


def mlp_forward(x, w1_b, b1, w2_b, b2, w3_p, b3_p):
    batch, in_features = x.shape
    assert in_features == INPUT_SIZE

    # --- Batch tiling: multiple of 8 sublanes; aim for >= 2 grid steps so the
    # "parallel" batch axis can be sharded across v7x's 2 TensorCores. ---
    b8 = _round_up(batch, 8)
    tb = min(MAX_BATCH_TILE, _round_up(pl.cdiv(b8, 2), 8))
    tb = max(tb, 8)
    padded_batch = _round_up(batch, tb)
    x_p = x if padded_batch == batch else jnp.pad(x, ((0, padded_batch - batch), (0, 0)))
    grid = (padded_batch // tb,)

    flops = 2 * padded_batch * (
        INPUT_SIZE * HIDDEN1 + HIDDEN1 * HIDDEN2 + HIDDEN2 * PADDED_OUT
    )
    bytes_accessed = (
        padded_batch * INPUT_SIZE * 4            # x (f32, read once)
        + w1_b.size * 2 + w2_b.size * 2 + w3_p.size * 2
        + b1.size * 4 + b2.size * 4 + b3_p.size * 4
        + padded_batch * PADDED_OUT * 4          # padded f32 output writeback
    )

    out_padded = pl.pallas_call(
        mlp_kernel,
        out_shape=jax.ShapeDtypeStruct((padded_batch, PADDED_OUT), jnp.float32),
        grid=grid,
        in_specs=[
            # x: tiled over batch, full 511-wide last dim (no host-side K pad);
            # double-buffered across grid steps so DMA overlaps compute.
            pl.BlockSpec((tb, INPUT_SIZE), lambda i: (i, 0)),
            # weights / biases: constant block index -> VMEM-resident, no re-DMA.
            # (pipeline_mode=pl.Buffered(1) would free ~0.4 MiB more; skipped — not needed.)
            pl.BlockSpec((INPUT_SIZE, HIDDEN1), lambda i: (0, 0)),
            pl.BlockSpec((1, HIDDEN1), lambda i: (0, 0)),
            pl.BlockSpec((HIDDEN1, HIDDEN2), lambda i: (0, 0)),
            pl.BlockSpec((1, HIDDEN2), lambda i: (0, 0)),
            pl.BlockSpec((HIDDEN2, PADDED_OUT), lambda i: (0, 0)),
            pl.BlockSpec((1, PADDED_OUT), lambda i: (0, 0)),
        ],
        out_specs=pl.BlockSpec((tb, PADDED_OUT), lambda i: (i, 0)),
        compiler_params=pltpu.CompilerParams(
            dimension_semantics=("parallel",),
            vmem_limit_bytes=VMEM_LIMIT_BYTES,
        ),
        cost_estimate=pl.CostEstimate(
            flops=flops, transcendentals=0, bytes_accessed=bytes_accessed
        ),
    )(x_p, w1_b, b1, w2_b, b2, w3_p, b3_p)

    return out_padded[:batch, :OUTPUT_SIZE]


def init_params(key):
    # Deterministic init mimicking nn.Linear's uniform(-1/sqrt(fan_in), 1/sqrt(fan_in)).
    def linear_init(k, fan_in, fan_out):
        kw, kb = jax.random.split(k)
        bound = 1.0 / jnp.sqrt(jnp.float32(fan_in))
        w = jax.random.uniform(kw, (fan_in, fan_out), jnp.float32, -bound, bound)
        b = jax.random.uniform(kb, (1, fan_out), jnp.float32, -bound, bound)
        return w, b

    k1, k2, k3 = jax.random.split(key, 3)
    w1, b1 = linear_init(k1, INPUT_SIZE, HIDDEN1)
    w2, b2 = linear_init(k2, HIDDEN1, HIDDEN2)
    w3, b3 = linear_init(k3, HIDDEN2, OUTPUT_SIZE)
    return w1, b1, w2, b2, w3, b3


def reference_forward(x, w1, b1, w2, b2, w3, b3):
    # Mirror the kernel's bf16 storage of x / weights / activations (f32 accumulate).
    def bf(a):
        return a.astype(jnp.bfloat16).astype(jnp.float32)

    h1 = jnp.maximum(bf(x) @ bf(w1) + b1, 0.0)
    h2 = jnp.maximum(bf(h1) @ bf(w2) + b2, 0.0)
    return bf(h2) @ bf(w3) + b3


if __name__ == "__main__":
    key = jax.random.PRNGKey(0)
    k_params, k_x = jax.random.split(key)

    batch = 8
    x = jax.random.normal(k_x, (batch, INPUT_SIZE), dtype=jnp.float32)
    raw_params = init_params(k_params)

    # One-time weight prep (bf16 casts + lane-dense fc3), reused across forwards.
    prepped = prepare_params(*raw_params)

    out = mlp_forward(x, *prepped)
    out = jax.block_until_ready(out)

    ref = reference_forward(x, *raw_params)
    assert out.shape == (batch, OUTPUT_SIZE)
    assert jnp.allclose(out, ref, atol=2e-3, rtol=2e-3), "mismatch vs reference"

    print("KERNEL_OK")
</pallas_src>

<mosaic_0001>
module attributes {stable_mosaic.version = 11 : i64} {
  func.func @mlp_kernel(%arg0: i32, %arg1: memref<8x511xf32, #tpu.memory_space<vmem>>, %arg2: memref<511x256xbf16, #tpu.memory_space<vmem>>, %arg3: memref<1x256xf32, #tpu.memory_space<vmem>>, %arg4: memref<256x128xbf16, #tpu.memory_space<vmem>>, %arg5: memref<1x128xf32, #tpu.memory_space<vmem>>, %arg6: memref<128x128xbf16, #tpu.memory_space<vmem>>, %arg7: memref<1x128xf32, #tpu.memory_space<vmem>>, %arg8: memref<8x128xf32, #tpu.memory_space<vmem>>) attributes {dimension_semantics = [#tpu.dimension_semantics<parallel>], iteration_bounds = array<i64: 1>, scalar_prefetch = 0 : i64, scratch_operands = 0 : i64, tpu.core_type = #tpu.core_type<tc>, window_params = [{transform_indices = @transform_0, window_bounds = array<i64: 8, 511>}, {pipeline_mode = #tpu.pipeline_mode<synchronous>, transform_indices = @transform_1, window_bounds = array<i64: 511, 256>}, {pipeline_mode = #tpu.pipeline_mode<synchronous>, transform_indices = @transform_2, window_bounds = array<i64: 1, 256>}, {pipeline_mode = #tpu.pipeline_mode<synchronous>, transform_indices = @transform_3, window_bounds = array<i64: 256, 128>}, {pipeline_mode = #tpu.pipeline_mode<synchronous>, transform_indices = @transform_4, window_bounds = array<i64: 1, 128>}, {pipeline_mode = #tpu.pipeline_mode<synchronous>, transform_indices = @transform_5, window_bounds = array<i64: 128, 128>}, {pipeline_mode = #tpu.pipeline_mode<synchronous>, transform_indices = @transform_6, window_bounds = array<i64: 1, 128>}, {transform_indices = @transform_7, window_bounds = array<i64: 8, 128>}]} {
    %c0 = arith.constant 0 : index
    %c0_0 = arith.constant 0 : index
    %0 = vector.load %arg1[%c0, %c0_0] : memref<8x511xf32, #tpu.memory_space<vmem>>, vector<8x511xf32>
    %1 = arith.truncf %0 : vector<8x511xf32> to vector<8x511xbf16>
    %c0_1 = arith.constant 0 : index
    %c0_2 = arith.constant 0 : index
    %2 = vector.load %arg2[%c0_1, %c0_2] : memref<511x256xbf16, #tpu.memory_space<vmem>>, vector<511x256xbf16>
    %cst = arith.constant dense<0.000000e+00> : vector<8x256xf32>
    %3 = tpu.matmul %1, %2, %cst {dimension_numbers = #tpu.dot_dimension_numbers<[1], [0], [0], [1], [0, 0, 1, 1], [], []>} : vector<8x511xbf16>, vector<511x256xbf16>, vector<8x256xf32> -> vector<8x256xf32>
    %c0_3 = arith.constant 0 : index
    %c0_4 = arith.constant 0 : index
    %4 = vector.load %arg3[%c0_3, %c0_4] : memref<1x256xf32, #tpu.memory_space<vmem>>, vector<1x256xf32>
    %5 = vector.broadcast %4 : vector<1x256xf32> to vector<8x256xf32>
    %6 = arith.addf %3, %5 : vector<8x256xf32>
    %cst_5 = arith.constant 0.000000e+00 : f32
    %7 = vector.broadcast %cst_5 : f32 to vector<8x256xf32>
    %8 = arith.maximumf %6, %7 : vector<8x256xf32>
    %9 = arith.truncf %8 : vector<8x256xf32> to vector<8x256xbf16>
    %c0_6 = arith.constant 0 : index
    %c0_7 = arith.constant 0 : index
    %10 = vector.load %arg4[%c0_6, %c0_7] : memref<256x128xbf16, #tpu.memory_space<vmem>>, vector<256x128xbf16>
    %cst_8 = arith.constant dense<0.000000e+00> : vector<8x128xf32>
    %11 = tpu.matmul %9, %10, %cst_8 {dimension_numbers = #tpu.dot_dimension_numbers<[1], [0], [0], [1], [0, 0, 1, 1], [], []>} : vector<8x256xbf16>, vector<256x128xbf16>, vector<8x128xf32> -> vector<8x128xf32>
    %c0_9 = arith.constant 0 : index
    %c0_10 = arith.constant 0 : index
    %12 = vector.load %arg5[%c0_9, %c0_10] : memref<1x128xf32, #tpu.memory_space<vmem>>, vector<1x128xf32>
    %13 = vector.broadcast %12 : vector<1x128xf32> to vector<8x128xf32>
    %14 = arith.addf %11, %13 : vector<8x128xf32>
    %cst_11 = arith.constant 0.000000e+00 : f32
    %15 = vector.broadcast %cst_11 : f32 to vector<8x128xf32>
    %16 = arith.maximumf %14, %15 : vector<8x128xf32>
    %17 = arith.truncf %16 : vector<8x128xf32> to vector<8x128xbf16>
    %c0_12 = arith.constant 0 : index
    %c0_13 = arith.constant 0 : index
    %18 = vector.load %arg6[%c0_12, %c0_13] : memref<128x128xbf16, #tpu.memory_space<vmem>>, vector<128x128xbf16>
    %cst_14 = arith.constant dense<0.000000e+00> : vector<8x128xf32>
    %19 = tpu.matmul %17, %18, %cst_14 {dimension_numbers = #tpu.dot_dimension_numbers<[1], [0], [0], [1], [0, 0, 1, 1], [], []>} : vector<8x128xbf16>, vector<128x128xbf16>, vector<8x128xf32> -> vector<8x128xf32>
    %c0_15 = arith.constant 0 : index
    %c0_16 = arith.constant 0 : index
    %20 = vector.load %arg7[%c0_15, %c0_16] : memref<1x128xf32, #tpu.memory_space<vmem>>, vector<1x128xf32>
    %21 = vector.broadcast %20 : vector<1x128xf32> to vector<8x128xf32>
    %22 = arith.addf %19, %21 : vector<8x128xf32>
    %c0_17 = arith.constant 0 : index
    %c0_18 = arith.constant 0 : index
    %23 = vector.load %arg8[%c0_17, %c0_18] : memref<8x128xf32, #tpu.memory_space<vmem>>, vector<8x128xf32>
    tpu.vector_store %arg8[%c0_17, %c0_18], %22 {strides = array<i32>} : memref<8x128xf32, #tpu.memory_space<vmem>>, vector<8x128xf32>,
    return
  }
  func.func @transform_0(%arg0: i32) -> (i32, i32) {
    %c0_i32 = arith.constant 0 : i32
    %c0_i32_0 = arith.constant 0 : i32
    return %arg0, %c0_i32 : i32, i32
  }
  func.func @transform_1(%arg0: i32) -> (i32, i32) {
    %c0_i32 = arith.constant 0 : i32
    %c0_i32_0 = arith.constant 0 : i32
    %c0_i32_1 = arith.constant 0 : i32
    return %c0_i32, %c0_i32_0 : i32, i32
  }
  func.func @transform_2(%arg0: i32) -> (i32, i32) {
    %c0_i32 = arith.constant 0 : i32
    %c0_i32_0 = arith.constant 0 : i32
    %c0_i32_1 = arith.constant 0 : i32
    return %c0_i32, %c0_i32_0 : i32, i32
  }
  func.func @transform_3(%arg0: i32) -> (i32, i32) {
    %c0_i32 = arith.constant 0 : i32
    %c0_i32_0 = arith.constant 0 : i32
    %c0_i32_1 = arith.constant 0 : i32
    return %c0_i32, %c0_i32_0 : i32, i32
  }
  func.func @transform_4(%arg0: i32) -> (i32, i32) {
    %c0_i32 = arith.constant 0 : i32
    %c0_i32_0 = arith.constant 0 : i32
    %c0_i32_1 = arith.constant 0 : i32
    return %c0_i32, %c0_i32_0 : i32, i32
  }
  func.func @transform_5(%arg0: i32) -> (i32, i32) {
    %c0_i32 = arith.constant 0 : i32
    %c0_i32_0 = arith.constant 0 : i32
    %c0_i32_1 = arith.constant 0 : i32
    return %c0_i32, %c0_i32_0 : i32, i32
  }
  func.func @transform_6(%arg0: i32) -> (i32, i32) {
    %c0_i32 = arith.constant 0 : i32
    %c0_i32_0 = arith.constant 0 : i32
    %c0_i32_1 = arith.constant 0 : i32
    return %c0_i32, %c0_i32_0 : i32, i32
  }
  func.func @transform_7(%arg0: i32) -> (i32, i32) {
    %c0_i32 = arith.constant 0 : i32
    %c0_i32_0 = arith.constant 0 : i32
    return %arg0, %c0_i32 : i32, i32
  }
}

</mosaic_0001>

<llo_original>
// kernel: tpu_custom_call.1
$region0: #{tpu_custom_call.1}
  #allocation0 [shape = 'u32[]', space=smem, size = 0x4, offset = 0x4, fixed_abs, tag = 'smem constant byte address 0x4 - core index']
  #allocation1 [shape = 'u32[72,128]{1,0:T(1,128)}', space=vmem, size = 0x9000, scoped, tag = 'internal scratch']
  %s0 = inlined_call_operand.hbm [shape: f32[8,511], index: 0, kind: input, shape index: {}]
  %s1 = inlined_call_operand.hbm [shape: bf16[511,256], index: 1, kind: input, shape index: {}]
  %s2 = inlined_call_operand.hbm [shape: f32[1,256], index: 2, kind: input, shape index: {}]
  %s3 = inlined_call_operand.hbm [shape: bf16[256,128], index: 3, kind: input, shape index: {}]
  %s4 = inlined_call_operand.vmem [shape: f32[1,128], index: 4, kind: input, shape index: {}]
  %s5 = inlined_call_operand.hbm [shape: bf16[128,128], index: 5, kind: input, shape index: {}]
  %s6 = inlined_call_operand.vmem [shape: f32[1,128], index: 6, kind: input, shape index: {}]
  %s7 = inlined_call_operand.hbm [shape: f32[8,128], index: 7, kind: output, shape index: {}]
  %s8 = sld [smem:[#allocation0]]
  $region58: #{tpu_custom_call.1} parent=0
    _
  %s10 = ssub.s32 1, %s8
  %s11 = scalar_select 0, %s10, %s8
  $region1: #{tpu_custom_call.1} parent=0
    #allocation2 [shape = 'u8[16384]{0}', space=vmem, size = 0x4000, scoped, tag = 'input window, operand 0, single buffered']
    #allocation3 [shape = 's32[1]{0}', space=sflag, size = 0x4, scoped, tag = 'scoped memory for tpu_custom_call.1']
    #allocation4 [shape = 's32[1]{0}', space=sflag, size = 0x4, scoped, tag = 'scoped memory for tpu_custom_call.1']
    #allocation5 [shape = 'u8[262144]{0}', space=vmem, size = 0x40000, scoped, tag = 'input window, operand 1, single buffered']
    #allocation6 [shape = 's32[1]{0}', space=sflag, size = 0x4, scoped, tag = 'scoped memory for tpu_custom_call.1']
    #allocation7 [shape = 'u8[1024]{0}', space=vmem, size = 0x400, scoped, tag = 'input window, operand 2, single buffered']
    #allocation8 [shape = 'u8[65536]{0}', space=vmem, size = 0x10000, scoped, tag = 'input window, operand 3, single buffered']
    #allocation9 [shape = 's32[1]{0}', space=sflag, size = 0x4, scoped, tag = 'scoped memory for tpu_custom_call.1']
    #allocation10 [shape = 'u8[32768]{0}', space=vmem, size = 0x8000, scoped, tag = 'input window, operand 5, single buffered']
    #allocation11 [shape = 'u8[4096]{0}', space=vmem, size = 0x1000, scoped, tag = 'output window, operand 0, single buffered']
    %12 = vsyncpa [#allocation3], 0
    %13 = vsyncpa [#allocation6], 0
    %14 = vsyncpa [#allocation9], 0
    %15 = vsyncpa [#allocation4], 0
    // Predicated region
    $region2: #{tpu_custom_call.1} parent=1 // pred_check
      _
    $region3: #{tpu_custom_call.1} parent=1 // pred_check_branch
      %17 = sbr.rel (0) target = $region5
    $region4: #{tpu_custom_call.1} parent=1 // pred_region
      %19 = vsyncadd [#allocation3], 0
      %s21 = sshll.u32 %s0, 4
      %s22 = int_to_ptr.hbm [resolvable:$true] %s21
      %s23 = sshll.u32 [#allocation2], 4
      %s24 = int_to_ptr.vmem [resolvable:$true] %s23
      %26 = dma.hbm_to_vmem [thread:$0]  %s22, 512, %s24, [#allocation3]
    $region5: #{tpu_custom_call.1} parent=1 // pred_fallthru
      _
    // Predicated region
    $region6: #{tpu_custom_call.1} parent=1 // pred_check
      _
    $region7: #{tpu_custom_call.1} parent=1 // pred_check_branch
      %28 = sbr.rel (0) target = $region9
    $region8: #{tpu_custom_call.1} parent=1 // pred_region
      %30 = vsyncadd [#allocation6], 0
      %s31 = sshll.u32 %s1, 4
      %s32 = int_to_ptr.hbm [resolvable:$true] %s31
      %s33 = sshll.u32 [#allocation5], 4
      %s34 = int_to_ptr.vmem [resolvable:$true] %s33
      %39 = dma.hbm_to_vmem [thread:$0]  %s32, 8192, %s34, [#allocation6], 128, 128, 8
    $region9: #{tpu_custom_call.1} parent=1 // pred_fallthru
      _
    // Predicated region
    $region10: #{tpu_custom_call.1} parent=1 // pred_check
      _
    $region11: #{tpu_custom_call.1} parent=1 // pred_check_branch
      %41 = sbr.rel (0) target = $region13
    $region12: #{tpu_custom_call.1} parent=1 // pred_region
      %43 = vsyncadd [#allocation6], 0
      %s45 = sshll.u32 %s2, 4
      %s46 = int_to_ptr.hbm [resolvable:$true] %s45
      %s47 = sshll.u32 [#allocation7], 4
      %s48 = int_to_ptr.vmem [resolvable:$true] %s47
      %50 = dma.hbm_to_vmem [thread:$0]  %s46, 32, %s48, [#allocation6]
    $region13: #{tpu_custom_call.1} parent=1 // pred_fallthru
      _
    // Predicated region
    $region14: #{tpu_custom_call.1} parent=1 // pred_check
      _
    $region15: #{tpu_custom_call.1} parent=1 // pred_check_branch
      %52 = sbr.rel (0) target = $region17
    $region16: #{tpu_custom_call.1} parent=1 // pred_region
      %54 = vsyncadd [#allocation9], 0
      %s55 = sshll.u32 %s3, 4
      %s56 = int_to_ptr.hbm [resolvable:$true] %s55
      %s57 = sshll.u32 [#allocation8], 4
      %s58 = int_to_ptr.vmem [resolvable:$true] %s57
      %63 = dma.hbm_to_vmem [thread:$0]  %s56, 2048, %s58, [#allocation9], 64, 64, 4
    $region17: #{tpu_custom_call.1} parent=1 // pred_fallthru
      _
    // Predicated region
    $region18: #{tpu_custom_call.1} parent=1 // pred_check
      _
    $region19: #{tpu_custom_call.1} parent=1 // pred_check_branch
      %65 = sbr.rel (0) target = $region21
    $region20: #{tpu_custom_call.1} parent=1 // pred_region
      _
    $region21: #{tpu_custom_call.1} parent=1 // pred_fallthru
      _
    // Predicated region
    $region22: #{tpu_custom_call.1} parent=1 // pred_check
      _
    $region23: #{tpu_custom_call.1} parent=1 // pred_check_branch
      %67 = sbr.rel (0) target = $region25
    $region24: #{tpu_custom_call.1} parent=1 // pred_region
      %69 = vsyncadd [#allocation9], 0
      %s70 = sshll.u32 %s5, 4
      %s71 = int_to_ptr.hbm [resolvable:$true] %s70
      %s72 = sshll.u32 [#allocation10], 4
      %s73 = int_to_ptr.vmem [resolvable:$true] %s72
      %78 = dma.hbm_to_vmem [thread:$0]  %s71, 1024, %s73, [#allocation9], 64, 64, 4
    $region25: #{tpu_custom_call.1} parent=1 // pred_fallthru
      _
    // Predicated region
    $region26: #{tpu_custom_call.1} parent=1 // pred_check
      _
    $region27: #{tpu_custom_call.1} parent=1 // pred_check_branch
      %80 = sbr.rel (0) target = $region29
    $region28: #{tpu_custom_call.1} parent=1 // pred_region
      _
    $region29: #{tpu_custom_call.1} parent=1 // pred_fallthru
      _
    // Predicated region
    $region30: #{tpu_custom_call.1} parent=1 // pred_check
      _
    $region31: #{tpu_custom_call.1} parent=1 // pred_check_branch
      %82 = sbr.rel (0) target = $region33
    $region32: #{tpu_custom_call.1} parent=1 // pred_region
      %84 = dma.done [#allocation3], 512
    $region33: #{tpu_custom_call.1} parent=1 // pred_fallthru
      _
    // Predicated region
    $region34: #{tpu_custom_call.1} parent=1 // pred_check
      _
    $region35: #{tpu_custom_call.1} parent=1 // pred_check_branch
      %86 = sbr.rel (0) target = $region37
    $region36: #{tpu_custom_call.1} parent=1 // pred_region
      %88 = dma.done [#allocation6], 8192
    $region37: #{tpu_custom_call.1} parent=1 // pred_fallthru
      _
    // Predicated region
    $region38: #{tpu_custom_call.1} parent=1 // pred_check
      _
    $region39: #{tpu_custom_call.1} parent=1 // pred_check_branch
      %90 = sbr.rel (0) target = $region41
    $region40: #{tpu_custom_call.1} parent=1 // pred_region
      %92 = dma.done [#allocation6], 32
    $region41: #{tpu_custom_call.1} parent=1 // pred_fallthru
      _
    // Predicated region
    $region42: #{tpu_custom_call.1} parent=1 // pred_check
      _
    $region43: #{tpu_custom_call.1} parent=1 // pred_check_branch
      %94 = sbr.rel (0) target = $region45
    $region44: #{tpu_custom_call.1} parent=1 // pred_region
      %96 = dma.done [#allocation9], 2048
    $region45: #{tpu_custom_call.1} parent=1 // pred_fallthru
      _
    // Predicated region
    $region46: #{tpu_custom_call.1} parent=1 // pred_check
      _
    $region47: #{tpu_custom_call.1} parent=1 // pred_check_branch
      %98 = sbr.rel (0) target = $region49
    $region48: #{tpu_custom_call.1} parent=1 // pred_region
      %100 = dma.done [#allocation9], 1024
    $region49: #{tpu_custom_call.1} parent=1 // pred_fallthru
      _
    %v101 = vld [vmem:[#allocation2] sm:$0xff]
    %v102 = vld [vmem:[#allocation2 + $0x8] sm:$0xff]
    %v103 = vld [vmem:[#allocation2 + $0x10] sm:$0xff]
    %v104 = vld [vmem:[#allocation2 + $0x18] sm:$0xff]
    %v105 = vpack.c.bf16 %v101, %v101
    %v106 = vpack.c.bf16 %v102, %v102
    %v107 = vpack.c.bf16 %v103, %v103
    %v108 = vpack.c.bf16 %v104, %v104
    %v109 = vld [vmem:[#allocation5] sm:$0xff]
    %v110 = vld [vmem:[#allocation5 + $0x8] sm:$0xff]
    %v111 = vld [vmem:[#allocation5 + $0x10] sm:$0xff]
    %v112 = vld [vmem:[#allocation5 + $0x18] sm:$0xff]
    %v113 = vld [vmem:[#allocation5 + $0x20] sm:$0xff]
    %v114 = vld [vmem:[#allocation5 + $0x28] sm:$0xff]
    %v115 = vld [vmem:[#allocation5 + $0x30] sm:$0xff]
    %v116 = vld [vmem:[#allocation5 + $0x38] sm:$0xff]
    %v117 = vld [vmem:[#allocation5 + $0x40] sm:$0xff]
    %v118 = vld [vmem:[#allocation5 + $0x48] sm:$0xff]
    %v119 = vld [vmem:[#allocation5 + $0x50] sm:$0xff]
    %v120 = vld [vmem:[#allocation5 + $0x58] sm:$0xff]
    %v121 = vld [vmem:[#allocation5 + $0x60] sm:$0xff]
    %v122 = vld [vmem:[#allocation5 + $0x68] sm:$0xff]
    %v123 = vld [vmem:[#allocation5 + $0x70] sm:$0xff]
    %v124 = vld [vmem:[#allocation5 + $0x78] sm:$0xff]
    %v125 = vld [vmem:[#allocation5 + $0x80] sm:$0xff]
    %v126 = vld [vmem:[#allocation5 + $0x88] sm:$0xff]
    %v127 = vld [vmem:[#allocation5 + $0x90] sm:$0xff]
    %v128 = vld [vmem:[#allocation5 + $0x98] sm:$0xff]
    %v129 = vld [vmem:[#allocation5 + $0xa0] sm:$0xff]
    %v130 = vld [vmem:[#allocation5 + $0xa8] sm:$0xff]
    %v131 = vld [vmem:[#allocation5 + $0xb0] sm:$0xff]
    %v132 = vld [vmem:[#allocation5 + $0xb8] sm:$0xff]
    %v133 = vld [vmem:[#allocation5 + $0xc0] sm:$0xff]
    %v134 = vld [vmem:[#allocation5 + $0xc8] sm:$0xff]
    %v135 = vld [vmem:[#allocation5 + $0xd0] sm:$0xff]
    %v136 = vld [vmem:[#allocation5 + $0xd8] sm:$0xff]
    %v137 = vld [vmem:[#allocation5 + $0xe0] sm:$0xff]
    %v138 = vld [vmem:[#allocation5 + $0xe8] sm:$0xff]
    %v139 = vld [vmem:[#allocation5 + $0xf0] sm:$0xff]
    %v140 = vld [vmem:[#allocation5 + $0xf8] sm:$0xff]
    %v141 = vld [vmem:[#allocation5 + $0x100] sm:$0xff]
    %v142 = vld [vmem:[#allocation5 + $0x108] sm:$0xff]
    %v143 = vld [vmem:[#allocation5 + $0x110] sm:$0xff]
    %v144 = vld [vmem:[#allocation5 + $0x118] sm:$0xff]
    %v145 = vld [vmem:[#allocation5 + $0x120] sm:$0xff]
    %v146 = vld [vmem:[#allocation5 + $0x128] sm:$0xff]
    %v147 = vld [vmem:[#allocation5 + $0x130] sm:$0xff]
    %v148 = vld [vmem:[#allocation5 + $0x138] sm:$0xff]
    %v149 = vld [vmem:[#allocation5 + $0x140] sm:$0xff]
    %v150 = vld [vmem:[#allocation5 + $0x148] sm:$0xff]
    %v151 = vld [vmem:[#allocation5 + $0x150] sm:$0xff]
    %v152 = vld [vmem:[#allocation5 + $0x158] sm:$0xff]
    %v153 = vld [vmem:[#allocation5 + $0x160] sm:$0xff]
    %v154 = vld [vmem:[#allocation5 + $0x168] sm:$0xff]
    %v155 = vld [vmem:[#allocation5 + $0x170] sm:$0xff]
    %v156 = vld [vmem:[#allocation5 + $0x178] sm:$0xff]
    %v157 = vld [vmem:[#allocation5 + $0x180] sm:$0xff]
    %v158 = vld [vmem:[#allocation5 + $0x188] sm:$0xff]
    %v159 = vld [vmem:[#allocation5 + $0x190] sm:$0xff]
    %v160 = vld [vmem:[#allocation5 + $0x198] sm:$0xff]
    %v161 = vld [vmem:[#allocation5 + $0x1a0] sm:$0xff]
    %v162 = vld [vmem:[#allocation5 + $0x1a8] sm:$0xff]
    %v163 = vld [vmem:[#allocation5 + $0x1b0] sm:$0xff]
    %v164 = vld [vmem:[#allocation5 + $0x1b8] sm:$0xff]
    %v165 = vld [vmem:[#allocation5 + $0x1c0] sm:$0xff]
    %v166 = vld [vmem:[#allocation5 + $0x1c8] sm:$0xff]
    %v167 = vld [vmem:[#allocation5 + $0x1d0] sm:$0xff]
    %v168 = vld [vmem:[#allocation5 + $0x1d8] sm:$0xff]
    %v169 = vld [vmem:[#allocation5 + $0x1e0] sm:$0xff]
    %v170 = vld [vmem:[#allocation5 + $0x1e8] sm:$0xff]
    %v171 = vld [vmem:[#allocation5 + $0x1f0] sm:$0xff]
    %v172 = vld [vmem:[#allocation5 + $0x1f8] sm:$0xff]
    %v173 = vld [vmem:[#allocation7] sm:$0x3]
    %v175 = vperm.slane %v173, 0
    %v176 = vperm.slane %v173, 1
    %v243 = vunpack.c.l.b16 %v109
    %v244 = vunpack.c.h.b16 %v109
    %v245 = vunpack.c.l.b16 %v110
    %v246 = vunpack.c.h.b16 %v110
    %v247 = vunpack.c.l.b16 %v111
    %v248 = vunpack.c.h.b16 %v111
    %v249 = vunpack.c.l.b16 %v112
    %v250 = vunpack.c.h.b16 %v112
    %v251 = vunpack.c.l.b16 %v113
    %v252 = vunpack.c.h.b16 %v113
    %v253 = vunpack.c.l.b16 %v114
    %v254 = vunpack.c.h.b16 %v114
    %v255 = vunpack.c.l.b16 %v115
    %v256 = vunpack.c.h.b16 %v115
    %v257 = vunpack.c.l.b16 %v116
    %v258 = vunpack.c.h.b16 %v116
    %v259 = vunpack.c.l.b16 %v117
    %v260 = vunpack.c.h.b16 %v117
    %v261 = vunpack.c.l.b16 %v118
    %v262 = vunpack.c.h.b16 %v118
    %v263 = vunpack.c.l.b16 %v119
    %v264 = vunpack.c.h.b16 %v119
    %v265 = vunpack.c.l.b16 %v120
    %v266 = vunpack.c.h.b16 %v120
    %v267 = vunpack.c.l.b16 %v121
    %v268 = vunpack.c.h.b16 %v121
    %v269 = vunpack.c.l.b16 %v122
    %v270 = vunpack.c.h.b16 %v122
    %v271 = vunpack.c.l.b16 %v123
    %v272 = vunpack.c.h.b16 %v123
    %v273 = vunpack.c.l.b16 %v124
    %v274 = vunpack.c.h.b16 %v124
    %v275 = vunpack.c.l.b16 %v125
    %v276 = vunpack.c.h.b16 %v125
    %v277 = vunpack.c.l.b16 %v126
    %v278 = vunpack.c.h.b16 %v126
    %v279 = vunpack.c.l.b16 %v127
    %v280 = vunpack.c.h.b16 %v127
    %v281 = vunpack.c.l.b16 %v128
    %v282 = vunpack.c.h.b16 %v128
    %v283 = vunpack.c.l.b16 %v129
    %v284 = vunpack.c.h.b16 %v129
    %v285 = vunpack.c.l.b16 %v130
    %v286 = vunpack.c.h.b16 %v130
    %v287 = vunpack.c.l.b16 %v131
    %v288 = vunpack.c.h.b16 %v131
    %v289 = vunpack.c.l.b16 %v132
    %v290 = vunpack.c.h.b16 %v132
    %v291 = vunpack.c.l.b16 %v133
    %v292 = vunpack.c.h.b16 %v133
    %v293 = vunpack.c.l.b16 %v134
    %v294 = vunpack.c.h.b16 %v134
    %v295 = vunpack.c.l.b16 %v135
    %v296 = vunpack.c.h.b16 %v135
    %v297 = vunpack.c.l.b16 %v136
    %v298 = vunpack.c.h.b16 %v136
    %v299 = vunpack.c.l.b16 %v137
    %v300 = vunpack.c.h.b16 %v137
    %v301 = vunpack.c.l.b16 %v138
    %v302 = vunpack.c.h.b16 %v138
    %v303 = vunpack.c.l.b16 %v139
    %v304 = vunpack.c.h.b16 %v139
    %v305 = vunpack.c.l.b16 %v140
    %v306 = vunpack.c.h.b16 %v140
    %v307 = vunpack.c.l.b16 %v141
    %v308 = vunpack.c.h.b16 %v141
    %v309 = vunpack.c.l.b16 %v142
    %v310 = vunpack.c.h.b16 %v142
    %v311 = vunpack.c.l.b16 %v143
    %v312 = vunpack.c.h.b16 %v143
    %v313 = vunpack.c.l.b16 %v144
    %v314 = vunpack.c.h.b16 %v144
    %v315 = vunpack.c.l.b16 %v145
    %v316 = vunpack.c.h.b16 %v145
    %v317 = vunpack.c.l.b16 %v146
    %v318 = vunpack.c.h.b16 %v146
    %v319 = vunpack.c.l.b16 %v147
    %v320 = vunpack.c.h.b16 %v147
    %v321 = vunpack.c.l.b16 %v148
    %v322 = vunpack.c.h.b16 %v148
    %v323 = vunpack.c.l.b16 %v149
    %v324 = vunpack.c.h.b16 %v149
    %v325 = vunpack.c.l.b16 %v150
    %v326 = vunpack.c.h.b16 %v150
    %v327 = vunpack.c.l.b16 %v151
    %v328 = vunpack.c.h.b16 %v151
    %v329 = vunpack.c.l.b16 %v152
    %v330 = vunpack.c.h.b16 %v152
    %v331 = vunpack.c.l.b16 %v153
    %v332 = vunpack.c.h.b16 %v153
    %v333 = vunpack.c.l.b16 %v154
    %v334 = vunpack.c.h.b16 %v154
    %v335 = vunpack.c.l.b16 %v155
    %v336 = vunpack.c.h.b16 %v155
    %v337 = vunpack.c.l.b16 %v156
    %v338 = vunpack.c.h.b16 %v156
    %v339 = vunpack.c.l.b16 %v157
    %v340 = vunpack.c.h.b16 %v157
    %v341 = vunpack.c.l.b16 %v158
    %v342 = vunpack.c.h.b16 %v158
    %v343 = vunpack.c.l.b16 %v159
    %v344 = vunpack.c.h.b16 %v159
    %v345 = vunpack.c.l.b16 %v160
    %v346 = vunpack.c.h.b16 %v160
    %v347 = vunpack.c.l.b16 %v161
    %v348 = vunpack.c.h.b16 %v161
    %v349 = vunpack.c.l.b16 %v162
    %v350 = vunpack.c.h.b16 %v162
    %v351 = vunpack.c.l.b16 %v163
    %v352 = vunpack.c.h.b16 %v163
    %v353 = vunpack.c.l.b16 %v164
    %v354 = vunpack.c.h.b16 %v164
    %v355 = vunpack.c.l.b16 %v165
    %v356 = vunpack.c.h.b16 %v165
    %v357 = vunpack.c.l.b16 %v166
    %v358 = vunpack.c.h.b16 %v166
    %v359 = vunpack.c.l.b16 %v167
    %v360 = vunpack.c.h.b16 %v167
    %v361 = vunpack.c.l.b16 %v168
    %v362 = vunpack.c.h.b16 %v168
    %v363 = vunpack.c.l.b16 %v169
    %v364 = vunpack.c.h.b16 %v169
    %v365 = vunpack.c.l.b16 %v170
    %v366 = vunpack.c.h.b16 %v170
    %v367 = vunpack.c.l.b16 %v171
    %v368 = vunpack.c.h.b16 %v171
    %v369 = vunpack.c.l.b16 %v172
    %v370 = vunpack.c.h.b16 %v172
    %v371 = vpack.c.b16 %v245, %v243
    %v372 = vpack.c.b16 %v246, %v244
    %v373 = vpack.c.b16 %v249, %v247
    %v374 = vpack.c.b16 %v250, %v248
    %v375 = vpack.c.b16 %v253, %v251
    %v376 = vpack.c.b16 %v254, %v252
    %v377 = vpack.c.b16 %v257, %v255
    %v378 = vpack.c.b16 %v258, %v256
    %v379 = vpack.c.b16 %v261, %v259
    %v380 = vpack.c.b16 %v262, %v260
    %v381 = vpack.c.b16 %v265, %v263
    %v382 = vpack.c.b16 %v266, %v264
    %v383 = vpack.c.b16 %v269, %v267
    %v384 = vpack.c.b16 %v270, %v268
    %v385 = vpack.c.b16 %v273, %v271
    %v386 = vpack.c.b16 %v274, %v272
    %v387 = vpack.c.b16 %v277, %v275
    %v388 = vpack.c.b16 %v278, %v276
    %v389 = vpack.c.b16 %v281, %v279
    %v390 = vpack.c.b16 %v282, %v280
    %v391 = vpack.c.b16 %v285, %v283
    %v392 = vpack.c.b16 %v286, %v284
    %v393 = vpack.c.b16 %v289, %v287
    %v394 = vpack.c.b16 %v290, %v288
    %v395 = vpack.c.b16 %v293, %v291
    %v396 = vpack.c.b16 %v294, %v292
    %v397 = vpack.c.b16 %v297, %v295
    %v398 = vpack.c.b16 %v298, %v296
    %v399 = vpack.c.b16 %v301, %v299
    %v400 = vpack.c.b16 %v302, %v300
    %v401 = vpack.c.b16 %v305, %v303
    %v402 = vpack.c.b16 %v306, %v304
    %v403 = vpack.c.b16 %v309, %v307
    %v404 = vpack.c.b16 %v310, %v308
    %v405 = vpack.c.b16 %v313, %v311
    %v406 = vpack.c.b16 %v314, %v312
    %v407 = vpack.c.b16 %v317, %v315
    %v408 = vpack.c.b16 %v318, %v316
    %v409 = vpack.c.b16 %v321, %v319
    %v410 = vpack.c.b16 %v322, %v320
    %v411 = vpack.c.b16 %v325, %v323
    %v412 = vpack.c.b16 %v326, %v324
    %v413 = vpack.c.b16 %v329, %v327
    %v414 = vpack.c.b16 %v330, %v328
    %v415 = vpack.c.b16 %v333, %v331
    %v416 = vpack.c.b16 %v334, %v332
    %v417 = vpack.c.b16 %v337, %v335
    %v418 = vpack.c.b16 %v338, %v336
    %v419 = vpack.c.b16 %v341, %v339
    %v420 = vpack.c.b16 %v342, %v340
    %v421 = vpack.c.b16 %v345, %v343
    %v422 = vpack.c.b16 %v346, %v344
    %v423 = vpack.c.b16 %v349, %v347
    %v424 = vpack.c.b16 %v350, %v348
    %v425 = vpack.c.b16 %v353, %v351
    %v426 = vpack.c.b16 %v354, %v352
    %v427 = vpack.c.b16 %v357, %v355
    %v428 = vpack.c.b16 %v358, %v356
    %v429 = vpack.c.b16 %v361, %v359
    %v430 = vpack.c.b16 %v362, %v360
    %v431 = vpack.c.b16 %v365, %v363
    %v432 = vpack.c.b16 %v366, %v364
    %v433 = vpack.c.b16 %v369, %v367
    %v434 = vpack.c.b16 %v370, %v368
    %vm497 = vcmask 1039360
    %v499 = vsel %vm497, %v108, 0
    %vm501 = vcmask 1046528
    %vm502 = vcmask 1047552
    %v503 = vsel %vm501, 4294967295, 65535
    %v504 = vsel %vm502, %v503, 0
    %v506 = vand.u32 %v433, %v504
    %v509 = vand.u32 %v434, %v504
    %511 = vmatpush.bf16.msra.mxu0 %v385
    %512 = vmatpush.bf16.msra.mxu0 %v383
    %513 = vmatpush.bf16.msra.mxu0 %v381
    %514 = vmatpush.bf16.msra.mxu0 %v379
    %515 = vmatpush.bf16.msra.mxu0 %v377
    %516 = vmatpush.bf16.msra.mxu0 %v375
    %517 = vmatpush.bf16.msra.mxu0 %v373
    %518 = vmatpush.bf16.msra.mxu0 %v371
    %519 = vmatmul.bf16.gmra.mxu0 %v105
    %v520 = vpop.f32.mrf.mxu0
    %v521 = vadd.f32 %v175, %v520
    %v522 = vpop.f32.mrf.mxu0
    %523 = vdwg.mxu0
    %524 = vmatpush.bf16.msra.mxu0 %v401
    %525 = vmatpush.bf16.msra.mxu0 %v399
    %526 = vmatpush.bf16.msra.mxu0 %v397
    %527 = vmatpush.bf16.msra.mxu0 %v395
    %528 = vmatpush.bf16.msra.mxu0 %v393
    %529 = vmatpush.bf16.msra.mxu0 %v391
    %530 = vmatpush.bf16.msra.mxu0 %v389
    %531 = vmatpush.bf16.msra.mxu0 %v387
    %532 = vmatmul.bf16.gmra.mxu0 %v106
    %v533 = vpop.f32.mrf.mxu0
    %v534 = vadd.f32 %v521, %v533
    %v535 = vpop.f32.mrf.mxu0
    %536 = vdwg.mxu0
    %537 = vmatpush.bf16.msra.mxu0 %v417
    %538 = vmatpush.bf16.msra.mxu0 %v415
    %539 = vmatpush.bf16.msra.mxu0 %v413
    %540 = vmatpush.bf16.msra.mxu0 %v411
    %541 = vmatpush.bf16.msra.mxu0 %v409
    %542 = vmatpush.bf16.msra.mxu0 %v407
    %543 = vmatpush.bf16.msra.mxu0 %v405
    %544 = vmatpush.bf16.msra.mxu0 %v403
    %545 = vmatmul.bf16.gmra.mxu0 %v107
    %v546 = vpop.f32.mrf.mxu0
    %v547 = vadd.f32 %v534, %v546
    %v548 = vpop.f32.mrf.mxu0
    %549 = vdwg.mxu0
    %550 = vmatpush.bf16.msra.mxu0 %v506
    %551 = vmatpush.bf16.msra.mxu0 %v431
    %552 = vmatpush.bf16.msra.mxu0 %v429
    %553 = vmatpush.bf16.msra.mxu0 %v427
    %554 = vmatpush.bf16.msra.mxu0 %v425
    %555 = vmatpush.bf16.msra.mxu0 %v423
    %556 = vmatpush.bf16.msra.mxu0 %v421
    %557 = vmatpush.bf16.msra.mxu0 %v419
    %558 = vmatmul.bf16.gmra.mxu0 %v499
    %v559 = vpop.f32.mrf.mxu0
    %v560 = vadd.f32 %v547, %v559
    %v561 = vpop.f32.mrf.mxu0
    %562 = vdwg.mxu0
    %563 = vmatpush.bf16.msra.mxu0 %v386
    %564 = vmatpush.bf16.msra.mxu0 %v384
    %565 = vmatpush.bf16.msra.mxu0 %v382
    %566 = vmatpush.bf16.msra.mxu0 %v380
    %567 = vmatpush.bf16.msra.mxu0 %v378
    %568 = vmatpush.bf16.msra.mxu0 %v376
    %569 = vmatpush.bf16.msra.mxu0 %v374
    %570 = vmatpush.bf16.msra.mxu0 %v372
    %571 = vmatmul.bf16.gmra.mxu0 %v105
    %v572 = vpop.f32.mrf.mxu0
    %v573 = vadd.f32 %v176, %v572
    %v574 = vpop.f32.mrf.mxu0
    %575 = vdwg.mxu0
    %576 = vmatpush.bf16.msra.mxu0 %v402
    %577 = vmatpush.bf16.msra.mxu0 %v400
    %578 = vmatpush.bf16.msra.mxu0 %v398
    %579 = vmatpush.bf16.msra.mxu0 %v396
    %580 = vmatpush.bf16.msra.mxu0 %v394
    %581 = vmatpush.bf16.msra.mxu0 %v392
    %582 = vmatpush.bf16.msra.mxu0 %v390
    %583 = vmatpush.bf16.msra.mxu0 %v388
    %584 = vmatmul.bf16.gmra.mxu0 %v106
    %v585 = vpop.f32.mrf.mxu0
    %v586 = vadd.f32 %v573, %v585
    %v587 = vpop.f32.mrf.mxu0
    %588 = vdwg.mxu0
    %589 = vmatpush.bf16.msra.mxu0 %v418
    %590 = vmatpush.bf16.msra.mxu0 %v416
    %591 = vmatpush.bf16.msra.mxu0 %v414
    %592 = vmatpush.bf16.msra.mxu0 %v412
    %593 = vmatpush.bf16.msra.mxu0 %v410
    %594 = vmatpush.bf16.msra.mxu0 %v408
    %595 = vmatpush.bf16.msra.mxu0 %v406
    %596 = vmatpush.bf16.msra.mxu0 %v404
    %597 = vmatmul.bf16.gmra.mxu0 %v107
    %v598 = vpop.f32.mrf.mxu0
    %v599 = vadd.f32 %v586, %v598
    %v600 = vpop.f32.mrf.mxu0
    %601 = vdwg.mxu0
    %602 = vmatpush.bf16.msra.mxu0 %v509
    %603 = vmatpush.bf16.msra.mxu0 %v432
    %604 = vmatpush.bf16.msra.mxu0 %v430
    %605 = vmatpush.bf16.msra.mxu0 %v428
    %606 = vmatpush.bf16.msra.mxu0 %v426
    %607 = vmatpush.bf16.msra.mxu0 %v424
    %608 = vmatpush.bf16.msra.mxu0 %v422
    %609 = vmatpush.bf16.msra.mxu0 %v420
    %610 = vmatmul.bf16.gmra.mxu0 %v499
    %v611 = vpop.f32.mrf.mxu0
    %v612 = vadd.f32 %v599, %v611
    %v613 = vpop.f32.mrf.mxu0
    %614 = vdwg.mxu0
    %v615 = vmax.f32 %v560, 0.0
    %v616 = vmax.f32 %v612, 0.0
    %v617 = vpack.c.bf16 %v615, %v615
    %v618 = vpack.c.bf16 %v616, %v616
    %v619 = vld [vmem:[#allocation8] sm:$0xf]
    %v620 = vld [vmem:[#allocation8 + $0x4] sm:$0xf]
    %v621 = vld [vmem:[#allocation8 + $0x8] sm:$0xf]
    %v622 = vld [vmem:[#allocation8 + $0xc] sm:$0xf]
    %v623 = vld [vmem:[#allocation8 + $0x10] sm:$0xf]
    %v624 = vld [vmem:[#allocation8 + $0x14] sm:$0xf]
    %v625 = vld [vmem:[#allocation8 + $0x18] sm:$0xf]
    %v626 = vld [vmem:[#allocation8 + $0x1c] sm:$0xf]
    %v627 = vld [vmem:[#allocation8 + $0x20] sm:$0xf]
    %v628 = vld [vmem:[#allocation8 + $0x24] sm:$0xf]
    %v629 = vld [vmem:[#allocation8 + $0x28] sm:$0xf]
    %v630 = vld [vmem:[#allocation8 + $0x2c] sm:$0xf]
    %v631 = vld [vmem:[#allocation8 + $0x30] sm:$0xf]
    %v632 = vld [vmem:[#allocation8 + $0x34] sm:$0xf]
    %v633 = vld [vmem:[#allocation8 + $0x38] sm:$0xf]
    %v634 = vld [vmem:[#allocation8 + $0x3c] sm:$0xf]
    %v635 = vld [vmem:[#allocation8 + $0x40] sm:$0xf]
    %v636 = vld [vmem:[#allocation8 + $0x44] sm:$0xf]
    %v637 = vld [vmem:[#allocation8 + $0x48] sm:$0xf]
    %v638 = vld [vmem:[#allocation8 + $0x4c] sm:$0xf]
    %v639 = vld [vmem:[#allocation8 + $0x50] sm:$0xf]
    %v640 = vld [vmem:[#allocation8 + $0x54] sm:$0xf]
    %v641 = vld [vmem:[#allocation8 + $0x58] sm:$0xf]
    %v642 = vld [vmem:[#allocation8 + $0x5c] sm:$0xf]
    %v643 = vld [vmem:[#allocation8 + $0x60] sm:$0xf]
    %v644 = vld [vmem:[#allocation8 + $0x64] sm:$0xf]
    %v645 = vld [vmem:[#allocation8 + $0x68] sm:$0xf]
    %v646 = vld [vmem:[#allocation8 + $0x6c] sm:$0xf]
    %v647 = vld [vmem:[#allocation8 + $0x70] sm:$0xf]
    %v648 = vld [vmem:[#allocation8 + $0x74] sm:$0xf]
    %v649 = vld [vmem:[#allocation8 + $0x78] sm:$0xf]
    %v650 = vld [vmem:[#allocation8 + $0x7c] sm:$0xf]
    %v651 = vld [vmem:[%s4] sm:$0x1]
    %v653 = vperm.slane %v651, 0
    %v687 = vunpack.c.l.b16 %v619
    %v688 = vunpack.c.l.b16 %v620
    %v689 = vunpack.c.l.b16 %v621
    %v690 = vunpack.c.l.b16 %v622
    %v691 = vunpack.c.l.b16 %v623
    %v692 = vunpack.c.l.b16 %v624
    %v693 = vunpack.c.l.b16 %v625
    %v694 = vunpack.c.l.b16 %v626
    %v695 = vunpack.c.l.b16 %v627
    %v696 = vunpack.c.l.b16 %v628
    %v697 = vunpack.c.l.b16 %v629
    %v698 = vunpack.c.l.b16 %v630
    %v699 = vunpack.c.l.b16 %v631
    %v700 = vunpack.c.l.b16 %v632
    %v701 = vunpack.c.l.b16 %v633
    %v702 = vunpack.c.l.b16 %v634
    %v703 = vunpack.c.l.b16 %v635
    %v704 = vunpack.c.l.b16 %v636
    %v705 = vunpack.c.l.b16 %v637
    %v706 = vunpack.c.l.b16 %v638
    %v707 = vunpack.c.l.b16 %v639
    %v708 = vunpack.c.l.b16 %v640
    %v709 = vunpack.c.l.b16 %v641
    %v710 = vunpack.c.l.b16 %v642
    %v711 = vunpack.c.l.b16 %v643
    %v712 = vunpack.c.l.b16 %v644
    %v713 = vunpack.c.l.b16 %v645
    %v714 = vunpack.c.l.b16 %v646
    %v715 = vunpack.c.l.b16 %v647
    %v716 = vunpack.c.l.b16 %v648
    %v717 = vunpack.c.l.b16 %v649
    %v718 = vunpack.c.l.b16 %v650
    %v719 = vpack.c.b16 %v688, %v687
    %v720 = vpack.c.b16 %v690, %v689
    %v721 = vpack.c.b16 %v692, %v691
    %v722 = vpack.c.b16 %v694, %v693
    %v723 = vpack.c.b16 %v696, %v695
    %v724 = vpack.c.b16 %v698, %v697
    %v725 = vpack.c.b16 %v700, %v699
    %v726 = vpack.c.b16 %v702, %v701
    %v727 = vpack.c.b16 %v704, %v703
    %v728 = vpack.c.b16 %v706, %v705
    %v729 = vpack.c.b16 %v708, %v707
    %v730 = vpack.c.b16 %v710, %v709
    %v731 = vpack.c.b16 %v712, %v711
    %v732 = vpack.c.b16 %v714, %v713
    %v733 = vpack.c.b16 %v716, %v715
    %v734 = vpack.c.b16 %v718, %v717
    %751 = vmatpush.bf16.msra.mxu0 %v726
    %752 = vmatpush.bf16.msra.mxu0 %v725
    %753 = vmatpush.bf16.msra.mxu0 %v724
    %754 = vmatpush.bf16.msra.mxu0 %v723
    %755 = vmatpush.bf16.msra.mxu0 %v722
    %756 = vmatpush.bf16.msra.mxu0 %v721
    %757 = vmatpush.bf16.msra.mxu0 %v720
    %758 = vmatpush.bf16.msra.mxu0 %v719
    %759 = vmatmul.bf16.gmra.mxu0 %v617
    %v760 = vpop.f32.mrf.mxu0
    %v761 = vadd.f32 %v653, %v760
    %v762 = vpop.f32.mrf.mxu0
    %763 = vdwg.mxu0
    %764 = vmatpush.bf16.msra.mxu0 %v734
    %765 = vmatpush.bf16.msra.mxu0 %v733
    %766 = vmatpush.bf16.msra.mxu0 %v732
    %767 = vmatpush.bf16.msra.mxu0 %v731
    %768 = vmatpush.bf16.msra.mxu0 %v730
    %769 = vmatpush.bf16.msra.mxu0 %v729
    %770 = vmatpush.bf16.msra.mxu0 %v728
    %771 = vmatpush.bf16.msra.mxu0 %v727
    %772 = vmatmul.bf16.gmra.mxu0 %v618
    %v773 = vpop.f32.mrf.mxu0
    %v774 = vadd.f32 %v761, %v773
    %v775 = vpop.f32.mrf.mxu0
    %776 = vdwg.mxu0
    %v777 = vmax.f32 %v774, 0.0
    %v778 = vpack.c.bf16 %v777, %v777
    %v779 = vld [vmem:[#allocation10] sm:$0xf]
    %v780 = vld [vmem:[#allocation10 + $0x4] sm:$0xf]
    %v781 = vld [vmem:[#allocation10 + $0x8] sm:$0xf]
    %v782 = vld [vmem:[#allocation10 + $0xc] sm:$0xf]
    %v783 = vld [vmem:[#allocation10 + $0x10] sm:$0xf]
    %v784 = vld [vmem:[#allocation10 + $0x14] sm:$0xf]
    %v785 = vld [vmem:[#allocation10 + $0x18] sm:$0xf]
    %v786 = vld [vmem:[#allocation10 + $0x1c] sm:$0xf]
    %v787 = vld [vmem:[#allocation10 + $0x20] sm:$0xf]
    %v788 = vld [vmem:[#allocation10 + $0x24] sm:$0xf]
    %v789 = vld [vmem:[#allocation10 + $0x28] sm:$0xf]
    %v790 = vld [vmem:[#allocation10 + $0x2c] sm:$0xf]
    %v791 = vld [vmem:[#allocation10 + $0x30] sm:$0xf]
    %v792 = vld [vmem:[#allocation10 + $0x34] sm:$0xf]
    %v793 = vld [vmem:[#allocation10 + $0x38] sm:$0xf]
    %v794 = vld [vmem:[#allocation10 + $0x3c] sm:$0xf]
    %v795 = vld [vmem:[%s6] sm:$0x1]
    %v797 = vperm.slane %v795, 0
    %v815 = vunpack.c.l.b16 %v779
    %v816 = vunpack.c.l.b16 %v780
    %v817 = vunpack.c.l.b16 %v781
    %v818 = vunpack.c.l.b16 %v782
    %v819 = vunpack.c.l.b16 %v783
    %v820 = vunpack.c.l.b16 %v784
    %v821 = vunpack.c.l.b16 %v785
    %v822 = vunpack.c.l.b16 %v786
    %v823 = vunpack.c.l.b16 %v787
    %v824 = vunpack.c.l.b16 %v788
    %v825 = vunpack.c.l.b16 %v789
    %v826 = vunpack.c.l.b16 %v790
    %v827 = vunpack.c.l.b16 %v791
    %v828 = vunpack.c.l.b16 %v792
    %v829 = vunpack.c.l.b16 %v793
    %v830 = vunpack.c.l.b16 %v794
    %v831 = vpack.c.b16 %v816, %v815
    %v832 = vpack.c.b16 %v818, %v817
    %v833 = vpack.c.b16 %v820, %v819
    %v834 = vpack.c.b16 %v822, %v821
    %v835 = vpack.c.b16 %v824, %v823
    %v836 = vpack.c.b16 %v826, %v825
    %v837 = vpack.c.b16 %v828, %v827
    %v838 = vpack.c.b16 %v830, %v829
    %847 = vmatpush.bf16.msra.mxu0 %v838
    %848 = vmatpush.bf16.msra.mxu0 %v837
    %849 = vmatpush.bf16.msra.mxu0 %v836
    %850 = vmatpush.bf16.msra.mxu0 %v835
    %851 = vmatpush.bf16.msra.mxu0 %v834
    %852 = vmatpush.bf16.msra.mxu0 %v833
    %853 = vmatpush.bf16.msra.mxu0 %v832
    %854 = vmatpush.bf16.msra.mxu0 %v831
    %855 = vmatmul.bf16.gmra.mxu0 %v778
    %v856 = vpop.f32.mrf.mxu0
    %v857 = vadd.f32 %v797, %v856
    %v858 = vpop.f32.mrf.mxu0
    %859 = vdwg.mxu0
    %860 = vst [vmem:[#allocation11] sm:$0xff] %v857
    // Predicated region
    $region50: #{tpu_custom_call.1} parent=1 // pred_check
      _
    $region51: #{tpu_custom_call.1} parent=1 // pred_check_branch
      %862 = sbr.rel (0) target = $region53
    $region52: #{tpu_custom_call.1} parent=1 // pred_region
      %864 = vsyncadd [#allocation4], 0
      %s866 = sshll.u32 [#allocation11], 4
      %s867 = int_to_ptr.vmem [resolvable:$true] %s866
      %s868 = sshll.u32 %s7, 4
      %s869 = int_to_ptr.hbm [resolvable:$true] %s868
      %871 = dma.vmem_to_hbm [thread:$0]  %s867, 128, %s869, [#allocation4]
    $region53: #{tpu_custom_call.1} parent=1 // pred_fallthru
      _
    // Predicated region
    $region54: #{tpu_custom_call.1} parent=1 // pred_check
      _
    $region55: #{tpu_custom_call.1} parent=1 // pred_check_branch
      %873 = sbr.rel (0) target = $region57
    $region56: #{tpu_custom_call.1} parent=1 // pred_region
      %875 = dma.done [#allocation4], 128
    $region57: #{tpu_custom_call.1} parent=1 // pred_fallthru
      _
    %876 = vsyncpa [#allocation3], 1
    %877 = vsyncpa [#allocation6], 1
    %878 = vsyncpa [#allocation9], 1
    %879 = vsyncpa [#allocation4], 1

</llo_original>
